<compile_context>
chip_gen: v6e
topology: v6e:2x2x1
jax: 0.10.0
libtpu: 0.0.40
codegen_flags: <defaults>
</compile_context>

<pallas_src>
import numpy as np
import jax
import jax.numpy as jnp
from jax.experimental import pallas as pl
from jax.experimental.pallas import tpu as pltpu


def _round_up(n, m):
    return ((n + m - 1) // m) * m


def _log_pdf_kernel(x_ref, mu_ref, w_ref, o_ref):
    """One (TB, TK) tile: o[0,0,:] += -0.5 * sum_j w[j] * (x[:, j] - mu[j])^2."""
    kk = pl.program_id(1)

    @pl.when(kk == 0)
    def _init():
        o_ref[...] = jnp.zeros_like(o_ref)

    # f32 accumulation regardless of the input dtype (bf16 inputs welcome).
    diff = x_ref[...].astype(jnp.float32) - mu_ref[...]               # (TB, TK)
    part = jnp.sum(diff * diff * w_ref[...], axis=1, keepdims=True)   # (TB, 1)
    tb = part.shape[0]
    # Lane-dense accumulate: (TB,1) column -> (1,TB) row.  Cheap XLU relayout;
    # avoids 128x-padded output buffers and masked vst.msk partial stores.
    o_ref[...] += (-0.5 * part).T.reshape(1, 1, tb)


def cf_prior_log_pdf(x, mu, logsigma, *, max_block_b=8192):
    """Pallas equivalent of CF_prior.forward (log_pdf of a diagonal Gaussian).

    Note: for tiny problems (a handful of vregs) plain XLA is as fast or
    faster; this kernel pays off for B in the thousands+.
    """
    b, k = x.shape
    itemsize = jnp.dtype(x.dtype).itemsize

    # ---- hoisted parameter-only math (plain JAX, outside the (B,K) hot loop) ----
    #   -0.5 * sum(log(2*pi*sigma2)) == -0.5*K*log(2*pi) - sum(logsigma)
    logsigma_f32 = logsigma.astype(jnp.float32)
    constant = jnp.float32(-0.5 * k * np.log(2.0 * np.pi)) - jnp.sum(logsigma_f32)
    inv_sigma2 = jnp.exp(-2.0 * logsigma_f32).reshape(1, k)           # (1, K)
    mu2d = mu.astype(jnp.float32).reshape(1, k)                       # (1, K)

    # ---- K tiling: only when K is large AND cleanly divisible (partial K
    # blocks would pollute the reduce, unlike partial batch blocks). ----
    tk = k
    if k > 4096 and k % 128 == 0:
        for cand in range(2048, 127, -128):
            if k % cand == 0:
                tk = cand
                break
    grid_k = k // tk

    # ---- generation-aware VMEM budget (v7x has only 64 MiB / TC). ----
    try:
        vmem_phys = int(getattr(pltpu.get_tpu_info(), "vmem_capacity_bytes",
                                64 * 1024 * 1024))
    except Exception:
        vmem_phys = 64 * 1024 * 1024
    budget = max(8 << 20, min(vmem_phys // 2, 48 << 20))

    def footprint(tb_):
        xb = 2 * tb_ * tk * itemsize                       # x tile, double-buffered
        tmp = 2 * tb_ * tk * 4                             # f32 diff / weighted-sq temps
        outb = 2 * 8 * _round_up(tb_, 128) * 4             # (1,1,TB) f32 out buffers
        par = 2 * 2 * 8 * _round_up(tk, 128) * 4           # mu + inv_sigma2 rows
        return xb + tmp + outb + par

    # ---- batch tile: target ~8 MiB of x per step, >= 512 rows, but keep
    # >= ~8 grid steps for pipelining / 2 TCs, and fit the VMEM budget. ----
    tb = max(512, (8 << 20) // max(1, tk * itemsize))
    tb = min(tb, max_block_b)
    min_steps = 8
    tb = min(tb, max(8, -(-b // min_steps)))
    tb = min(tb, _round_up(b, 8))
    tb = max(8, (tb // 8) * 8)
    while tb > 8 and footprint(tb) > budget:
        tb = max(8, ((tb // 2) // 8) * 8)

    grid_b = pl.cdiv(b, tb)                                # no host-side padding
    vmem_limit = int(min(vmem_phys, footprint(tb) + (16 << 20)))

    out = pl.pallas_call(
        _log_pdf_kernel,
        out_shape=jax.ShapeDtypeStruct((grid_b, 1, tb), jnp.float32),
        grid=(grid_b, grid_k),
        in_specs=[
            pl.BlockSpec((tb, tk), lambda i, kk: (i, kk)),   # x tile (pipelined)
            pl.BlockSpec((1, tk), lambda i, kk: (0, kk)),    # mu row
            pl.BlockSpec((1, tk), lambda i, kk: (0, kk)),    # inv_sigma2 row
        ],
        out_specs=pl.BlockSpec((1, 1, tb), lambda i, kk: (i, 0, 0)),  # lane-dense
        compiler_params=pltpu.CompilerParams(
            dimension_semantics=("parallel", "arbitrary"),
            vmem_limit_bytes=vmem_limit,
        ),
    )(x, mu2d, inv_sigma2)

    # Rows >= b are garbage from the partial last tile; slice them off.
    # Scalar normalizing constant added outside the kernel (O(B) work only).
    return out.reshape(-1)[:b] + constant


def reference_log_pdf(x, mu, logsigma):
    # Direct translation of CF_prior.log_pdf (the forward pass).
    sigma2 = jnp.exp(2.0 * logsigma)
    constant = -0.5 * jnp.sum(jnp.log(2.0 * np.pi * sigma2))
    diff = x - mu
    exponent = -0.5 * jnp.sum(diff * diff / sigma2, axis=1)
    return constant + exponent


if __name__ == "__main__":
    key = jax.random.PRNGKey(0)
    k_mu, k_x = jax.random.split(key)

    B, K = 8, 32  # small shapes: batch=8, dim=32

    # Deterministic parameter init, matching CF_prior.__init__:
    #   mu = randn(k) * (1 / sqrt(k / 2)),  logsigma = full(k, 0.1)
    xavier_stddev = 1.0 / np.sqrt(K / 2.0)
    mu = jax.random.normal(k_mu, (K,), dtype=jnp.float32) * xavier_stddev
    logsigma = jnp.full((K,), 0.1, dtype=jnp.float32)

    x = jax.random.normal(k_x, (B, K), dtype=jnp.float32)

    out = cf_prior_log_pdf(x, mu, logsigma)
    out = jax.block_until_ready(out)

    ref = reference_log_pdf(x, mu, logsigma)
    np.testing.assert_allclose(np.asarray(out), np.asarray(ref),
                               rtol=1e-5, atol=1e-5)
    print("KERNEL_OK")
</pallas_src>

<mosaic_0001>
module attributes {stable_mosaic.version = 11 : i64} {
  func.func @_log_pdf_kernel(%arg0: i32, %arg1: i32, %arg2: memref<8x32xf32, #tpu.memory_space<vmem>>, %arg3: memref<1x32xf32, #tpu.memory_space<vmem>>, %arg4: memref<1x32xf32, #tpu.memory_space<vmem>>, %arg5: memref<1x1x8xf32, #tpu.memory_space<vmem>>) attributes {dimension_semantics = [#tpu.dimension_semantics<parallel>, #tpu.dimension_semantics<arbitrary>], iteration_bounds = array<i64: 1, 1>, scalar_prefetch = 0 : i64, scratch_operands = 0 : i64, tpu.core_type = #tpu.core_type<tc>, window_params = [{transform_indices = @transform_0, window_bounds = array<i64: 8, 32>}, {transform_indices = @transform_1, window_bounds = array<i64: 1, 32>}, {transform_indices = @transform_2, window_bounds = array<i64: 1, 32>}, {transform_indices = @transform_3, window_bounds = array<i64: 1, 1, 8>}]} {
    %c0_i32 = arith.constant 0 : i32
    %0 = arith.cmpi eq, %arg1, %c0_i32 : i32
    %1 = arith.extui %0 : i1 to i32
    %c0_i32_0 = arith.constant 0 : i32
    %2 = arith.cmpi ne, %1, %c0_i32_0 : i32
    scf.if %2 {
      %cst_13 = arith.constant 0.000000e+00 : f32
      %20 = vector.broadcast %cst_13 : f32 to vector<1x1x8xf32>
      %c0_14 = arith.constant 0 : index
      %c0_15 = arith.constant 0 : index
      %c0_16 = arith.constant 0 : index
      %21 = vector.load %arg5[%c0_14, %c0_15, %c0_16] : memref<1x1x8xf32, #tpu.memory_space<vmem>>, vector<1x1x8xf32>
      tpu.vector_store %arg5[%c0_14, %c0_15, %c0_16], %20 {strides = array<i32>} : memref<1x1x8xf32, #tpu.memory_space<vmem>>, vector<1x1x8xf32>,
    } else {
    }
    %c0 = arith.constant 0 : index
    %c0_1 = arith.constant 0 : index
    %3 = vector.load %arg2[%c0, %c0_1] : memref<8x32xf32, #tpu.memory_space<vmem>>, vector<8x32xf32>
    %c0_2 = arith.constant 0 : index
    %c0_3 = arith.constant 0 : index
    %4 = vector.load %arg3[%c0_2, %c0_3] : memref<1x32xf32, #tpu.memory_space<vmem>>, vector<1x32xf32>
    %5 = vector.broadcast %4 : vector<1x32xf32> to vector<8x32xf32>
    %6 = arith.subf %3, %5 : vector<8x32xf32>
    %7 = arith.mulf %6, %6 : vector<8x32xf32>
    %c0_4 = arith.constant 0 : index
    %c0_5 = arith.constant 0 : index
    %8 = vector.load %arg4[%c0_4, %c0_5] : memref<1x32xf32, #tpu.memory_space<vmem>>, vector<1x32xf32>
    %9 = vector.broadcast %8 : vector<1x32xf32> to vector<8x32xf32>
    %10 = arith.mulf %7, %9 : vector<8x32xf32>
    %cst = arith.constant dense<0.000000e+00> : vector<8xf32>
    %11 = vector.multi_reduction <add>, %10, %cst [1] : vector<8x32xf32> to vector<8xf32>
    %12 = vector.shape_cast %11 : vector<8xf32> to vector<8x1xf32>
    %c0_6 = arith.constant 0 : index
    %c0_7 = arith.constant 0 : index
    %c0_8 = arith.constant 0 : index
    %13 = vector.load %arg5[%c0_6, %c0_7, %c0_8] : memref<1x1x8xf32, #tpu.memory_space<vmem>>, vector<1x1x8xf32>
    %cst_9 = arith.constant -5.000000e-01 : f32
    %14 = vector.broadcast %cst_9 : f32 to vector<8x1xf32>
    %15 = arith.mulf %14, %12 : vector<8x1xf32>
    %16 = tpu.transpose %15, [1, 0] : vector<8x1xf32> -> vector<1x8xf32>
    %17 = vector.shape_cast %16 : vector<1x8xf32> to vector<1x1x8xf32>
    %18 = arith.addf %13, %17 : vector<1x1x8xf32>
    %c0_10 = arith.constant 0 : index
    %c0_11 = arith.constant 0 : index
    %c0_12 = arith.constant 0 : index
    %19 = vector.load %arg5[%c0_10, %c0_11, %c0_12] : memref<1x1x8xf32, #tpu.memory_space<vmem>>, vector<1x1x8xf32>
    tpu.vector_store %arg5[%c0_10, %c0_11, %c0_12], %18 {strides = array<i32>} : memref<1x1x8xf32, #tpu.memory_space<vmem>>, vector<1x1x8xf32>,
    return
  }
  func.func @transform_0(%arg0: i32, %arg1: i32) -> (i32, i32) {
    %c0_i32 = arith.constant 0 : i32
    return %arg0, %arg1 : i32, i32
  }
  func.func @transform_1(%arg0: i32, %arg1: i32) -> (i32, i32) {
    %c0_i32 = arith.constant 0 : i32
    %c0_i32_0 = arith.constant 0 : i32
    return %c0_i32, %arg1 : i32, i32
  }
  func.func @transform_2(%arg0: i32, %arg1: i32) -> (i32, i32) {
    %c0_i32 = arith.constant 0 : i32
    %c0_i32_0 = arith.constant 0 : i32
    return %c0_i32, %arg1 : i32, i32
  }
  func.func @transform_3(%arg0: i32, %arg1: i32) -> (i32, i32, i32) {
    %c0_i32 = arith.constant 0 : i32
    %c0_i32_0 = arith.constant 0 : i32
    %c0_i32_1 = arith.constant 0 : i32
    return %arg0, %c0_i32, %c0_i32_0 : i32, i32, i32
  }
}

</mosaic_0001>

<llo_original>
// kernel: tpu_custom_call.1
$region0: #{tpu_custom_call.1}
  #allocation0 [shape = 'u32[]', space=smem, size = 0x4, offset = 0x4, fixed_abs, tag = 'smem constant byte address 0x4 - core index']
  #allocation1 [shape = 'u32[144,128]{1,0:T(1,128)}', space=vmem, size = 0x12000, scoped, tag = 'internal scratch']
  %s0 = inlined_call_operand.hbm [shape: f32[8,32], index: 0, kind: input, shape index: {}]
  %s1 = inlined_call_operand.vmem [shape: f32[1,32], index: 1, kind: input, shape index: {}]
  %s2 = inlined_call_operand.vmem [shape: f32[1,32], index: 2, kind: input, shape index: {}]
  %s3 = inlined_call_operand.hbm [shape: f32[1,1,8], index: 3, kind: output, shape index: {}]
  %s4 = sld [smem:[#allocation0]]
  $region30: #{tpu_custom_call.1} parent=0
    _
  %s6 = ssub.s32 1, %s4
  %s7 = scalar_select 0, %s6, %s4
  $region1: #{tpu_custom_call.1} parent=0
    #allocation2 [shape = 'u8[4096]{0}', space=vmem, size = 0x1000, scoped, tag = 'input window, operand 0, single buffered']
    #allocation3 [shape = 's32[1]{0}', space=sflag, size = 0x4, scoped, tag = 'scoped memory for tpu_custom_call.1']
    #allocation4 [shape = 's32[1]{0}', space=sflag, size = 0x4, scoped, tag = 'scoped memory for tpu_custom_call.1']
    #allocation5 [shape = 'u8[512]{0}', space=vmem, size = 0x400, scoped, tag = 'output window, operand 0, single buffered']
    %8 = vsyncpa [#allocation3], 0
    %9 = vsyncpa [#allocation4], 0
    // Predicated region
    $region2: #{tpu_custom_call.1} parent=1 // pred_check
      _
    $region3: #{tpu_custom_call.1} parent=1 // pred_check_branch
      %11 = sbr.rel (0) target = $region5
    $region4: #{tpu_custom_call.1} parent=1 // pred_region
      %s13 = ssub.s32 128, 128
      %14 = vsyncadd [#allocation3], %s13
      %s16 = sshll.u32 [#allocation2], 4
      %s17 = int_to_ptr.vmem [resolvable:$true] %s16
      %19 = dma.hbm_to_vmem [thread:$0]  %s0, 128, %s17, [#allocation3]
    $region5: #{tpu_custom_call.1} parent=1 // pred_fallthru
      _
    // Predicated region
    $region6: #{tpu_custom_call.1} parent=1 // pred_check
      _
    $region7: #{tpu_custom_call.1} parent=1 // pred_check_branch
      %21 = sbr.rel (0) target = $region9
    $region8: #{tpu_custom_call.1} parent=1 // pred_region
      _
    $region9: #{tpu_custom_call.1} parent=1 // pred_fallthru
      _
    // Predicated region
    $region10: #{tpu_custom_call.1} parent=1 // pred_check
      _
    $region11: #{tpu_custom_call.1} parent=1 // pred_check_branch
      %23 = sbr.rel (0) target = $region13
    $region12: #{tpu_custom_call.1} parent=1 // pred_region
      _
    $region13: #{tpu_custom_call.1} parent=1 // pred_fallthru
      _
    // Predicated region
    $region14: #{tpu_custom_call.1} parent=1 // pred_check
      _
    $region15: #{tpu_custom_call.1} parent=1 // pred_check_branch
      %25 = sbr.rel (0) target = $region17
    $region16: #{tpu_custom_call.1} parent=1 // pred_region
      %26 = dma.done [#allocation3], 128
    $region17: #{tpu_custom_call.1} parent=1 // pred_fallthru
      _
    %p27 = scmp.eq.s32.totalorder 0, 0
    // Predicated region
    $region18: #{tpu_custom_call.1} parent=1 // pred_check
      %p28 = pneg %p27
    $region19: #{tpu_custom_call.1} parent=1 // pred_check_branch
      %30 = sbr.rel (%p28) target = $region21
    $region20: #{tpu_custom_call.1} parent=1 // pred_region
      %vm31 = vcmask 57344
      %32 = vst.msk [vmem:[#allocation5] sm:$0x1] %vm31, 0.0
    $region21: #{tpu_custom_call.1} parent=1 // pred_fallthru
      _
    %v33 = vld [vmem:[#allocation2] sm:$0xff]
    %v34 = vld [vmem:[%s1] sm:$0x1]
    %v36 = vlaneseq
    %v37 = vshrl.u32 %v36, 7
    %v38 = vsub.s32 0, %v37
    %v39 = vrot.slane %v34, %v38
    %v41 = vsub.f32 %v33, %v39
    %v42 = vmul.f32 %v41, %v41
    %v43 = vld [vmem:[%s2] sm:$0x1]
    %v45 = vlaneseq
    %v46 = vshrl.u32 %v45, 7
    %v47 = vsub.s32 0, %v46
    %v48 = vrot.slane %v43, %v47
    %v50 = vmul.f32 %v42, %v48
    %vm51 = vcmask 261120
    %v52 = vsel %vm51, %v50, 0.0
    %53 = vadd.xlane.f32.xlu0 %v52
    %v54 = vpop.xlane.xlu0 %53
    %v55 = vld [vmem:[#allocation5] sm:$0x1]
    %v56 = vmul.f32 %v54, -0.5
    %57 = vxpose.xlu0.b32.start [1/16] %v56, 128
    %58 = vxpose.xlu0.b32.cont [2/16] 0.0, 128
    %59 = vxpose.xlu0.b32.cont [3/16] 0.0, 128
    %60 = vxpose.xlu0.b32.cont [4/16] 0.0, 128
    %61 = vxpose.xlu0.b32.cont [5/16] 0.0, 128
    %62 = vxpose.xlu0.b32.cont [6/16] 0.0, 128
    %63 = vxpose.xlu0.b32.cont [7/16] 0.0, 128
    %64 = vxpose.xlu0.b32.cont [8/16] 0.0, 128
    %65 = vxpose.xlu0.b32.cont [9/16] 0.0, 128
    %66 = vxpose.xlu0.b32.cont [10/16] 0.0, 128
    %67 = vxpose.xlu0.b32.cont [11/16] 0.0, 128
    %68 = vxpose.xlu0.b32.cont [12/16] 0.0, 128
    %69 = vxpose.xlu0.b32.cont [13/16] 0.0, 128
    %70 = vxpose.xlu0.b32.cont [14/16] 0.0, 128
    %71 = vxpose.xlu0.b32.cont [15/16] 0.0, 128
    %72 = vxpose.xlu0.b32.end [16/16] 0.0, 128
    %v73 = vpop.trf.xlu0
    %v74 = vpop.trf.xlu0
    %v75 = vpop.trf.xlu0
    %v76 = vpop.trf.xlu0
    %v77 = vpop.trf.xlu0
    %v78 = vpop.trf.xlu0
    %v79 = vpop.trf.xlu0
    %v80 = vpop.trf.xlu0
    %v81 = vpop.trf.xlu0
    %v82 = vpop.trf.xlu0
    %v83 = vpop.trf.xlu0
    %v84 = vpop.trf.xlu0
    %v85 = vpop.trf.xlu0
    %v86 = vpop.trf.xlu0
    %v87 = vpop.trf.xlu0
    %v88 = vpop.trf.xlu0
    %v89 = vadd.f32 %v55, %v73
    %vm90 = vcmask 57344
    %91 = vst.msk [vmem:[#allocation5] sm:$0x1] %vm90, %v89
    // Predicated region
    $region22: #{tpu_custom_call.1} parent=1 // pred_check
      _
    $region23: #{tpu_custom_call.1} parent=1 // pred_check_branch
      %93 = sbr.rel (0) target = $region25
    $region24: #{tpu_custom_call.1} parent=1 // pred_region
      %s95 = ssub.s32 16, 16
      %96 = vsyncadd [#allocation4], %s95
      %s98 = sshll.u32 [#allocation5], 4
      %s99 = int_to_ptr.vmem [resolvable:$true] %s98
      %101 = dma.vmem_to_hbm [thread:$0]  %s99, 16, %s3, [#allocation4]
    $region25: #{tpu_custom_call.1} parent=1 // pred_fallthru
      _
    // Predicated region
    $region26: #{tpu_custom_call.1} parent=1 // pred_check
      _
    $region27: #{tpu_custom_call.1} parent=1 // pred_check_branch
      %103 = sbr.rel (0) target = $region29
    $region28: #{tpu_custom_call.1} parent=1 // pred_region
      %104 = dma.done [#allocation4], 16
    $region29: #{tpu_custom_call.1} parent=1 // pred_fallthru
      _
    %105 = vsyncpa [#allocation3], 1
    %106 = vsyncpa [#allocation4], 1

</llo_original>
